<compile_context>
chip_gen: v7x
topology: tpu7x:2x2x1
jax: 0.10.0
libtpu: 0.0.40
codegen_flags: <defaults>
</compile_context>

<pallas_src>
import functools

import jax
import jax.numpy as jnp
from jax import lax
from jax.experimental import pallas as pl
from jax.experimental.pallas import tpu as pltpu

_EPS = 1.1920929e-07  # torch.finfo(torch.float32).eps, matches poptimizer _EPS


def _softplus(x):
    # PyTorch Softplus(beta=1, threshold=20): x if x > 20 else log1p(exp(x))
    return jnp.where(x > 20.0, x, jnp.log1p(jnp.exp(jnp.minimum(x, 20.0))))


def _head_kernel(x_ref, wet_ref, bet_ref, wct_ref, bct_ref, out_ref, *, split_row):
    """x_ref: (b_tile, Cin, l_tile) NCL slab; out_ref: (b_tile, 3M, l_tile) fused params.

    Output rows [0, 2M) are logits/loc (identity); rows [2M, 3M) are softplus(std) + eps.
    """
    b_tile, m3, l_tile = out_ref.shape
    c = wet_ref.shape[0]

    wet = wet_ref[...]                                   # (C, Cin)
    wct = wct_ref[...]                                   # (3M, C)
    # Hoist the bias lane-broadcasts out of the per-batch loop (broadcast_in_dim is not CSE'd).
    be = jnp.broadcast_to(bet_ref[...], (c, l_tile))     # (C, l_tile)
    bc = jnp.broadcast_to(bct_ref[...], (m3, l_tile))    # (3M, l_tile)

    def process(b):
        xb = x_ref[b]                                    # (Cin, l_tile), L on lanes
        # 1x1 conv == matmul with Cin contracted; weight-on-left keeps l_tile lane-dense.
        end = jnp.maximum(
            jnp.dot(wet, xb, preferred_element_type=jnp.float32) + be, 0.0)      # (C, l_tile)
        raw = jnp.dot(wct, end, preferred_element_type=jnp.float32) + bc         # (3M, l_tile)
        # Transcendentals only on the std block (static sublane slice), not the whole tile.
        std = _softplus(raw[split_row:, :]) + _EPS                                # (M, l_tile)
        out_ref[b] = jnp.concatenate([raw[:split_row, :], std], axis=0)           # (3M, l_tile)

    if b_tile <= 4:
        for b in range(b_tile):                          # small static unroll
            process(b)
    else:
        def body(b, carry):
            process(b)
            return carry
        lax.fori_loop(0, b_tile, body, 0)                # bounded live ranges for large b_tile


def _round_up(n, m):
    return -(-n // m) * m


def _vmem_budget_bytes():
    """(per-step pipelined-tile budget, explicit vmem_limit_bytes), generation-aware."""
    try:
        cap = pltpu.get_tpu_info().vmem_capacity_bytes   # 128 MiB v5e/v6e, 64 MiB per-TC on v7x
    except Exception:
        cap = 64 << 20                                   # assume the smallest generation
    budget = int(min(max(cap // 8, 6 << 20), 24 << 20))  # ~16 MiB on v5e/v6e, ~8 MiB on v7x
    limit = int(min(cap // 2, budget + (8 << 20)))       # headroom for weights + compiler scratch
    return budget, limit


def _pick_tiles(B, L, Cin, M3, budget):
    """Divisor-based B tiling, lane-dense L tiling; sublane-padding-correct VMEM accounting."""
    # Bytes per L element per batch row for the double-buffered input + output tiles
    # (second-to-last dims pad to multiples of 8 sublanes in VMEM).
    per_l = 2 * 4 * (_round_up(Cin, 8) + _round_up(M3, 8))
    row_bytes = per_l * L

    if row_bytes <= budget:
        l_tile = L                                       # full-L slabs: contiguous per-b reads
    else:
        # Only split L when a single (1, Cin, L) row slab would blow the budget; use a
        # 128-multiple tile (lane-dense) and let a cdiv grid mask the boundary block.
        l_tile = max(128, (budget // (per_l * 128)) * 128)
        l_tile = min(l_tile, _round_up(L, 128))

    per_b = per_l * l_tile
    cap = max(1, budget // per_b)
    if B >= 2:
        cap = min(cap, max(1, B // 2))                   # >=2 blocks on the parallel batch axis
    cap = min(cap, B)
    b_tile = 1
    for d in range(cap, 0, -1):
        if B % d == 0:
            b_tile = d
            break
    return b_tile, l_tile


def wave_net_head(x_ncl, params):
    """x_ncl: (B, Cin, L) float32, NCL exactly like the PyTorch module.

    Returns (logits, loc, scale), each (B, L, M) — the parameters of
    MixtureSameFamily(Categorical(logits), LogNormal(loc, scale)).
    """
    B, Cin, L = x_ncl.shape
    we, be, wl, bl, wm, bm, ws, bs = params
    C = we.shape[1]
    M = wl.shape[1]
    M3 = 3 * M

    # Fuse the three head convs into one matmul; weights/biases in weight-on-left layout.
    wet = we.T                                            # (C, Cin)
    bet = be.T                                            # (C, 1)
    wct = jnp.concatenate([wl, wm, ws], axis=1).T         # (3M, C) = [W_logit|W_mean|W_std]^T
    bct = jnp.concatenate([bl, bm, bs], axis=1).T         # (3M, 1)

    budget, vmem_limit = _vmem_budget_bytes()
    b_tile, l_tile = _pick_tiles(B, L, Cin, M3, budget)
    grid = (B // b_tile, pl.cdiv(L, l_tile))

    const = lambda bi, li: (0, 0)   # weights/biases: constant index map -> fetched once, resident

    cost = pl.CostEstimate(
        flops=2 * B * L * (Cin * C + C * M3),
        transcendentals=2 * B * L * M,
        bytes_accessed=4 * (B * Cin * L + B * M3 * L + Cin * C + C + C * M3 + M3),
    )

    fused = pl.pallas_call(
        functools.partial(_head_kernel, split_row=2 * M),
        out_shape=jax.ShapeDtypeStruct((B, M3, L), jnp.float32),
        grid_spec=pltpu.PrefetchScalarGridSpec(
            num_scalar_prefetch=0,
            grid=grid,
            in_specs=[
                pl.BlockSpec((b_tile, Cin, l_tile), lambda bi, li: (bi, 0, li)),  # x (NCL)
                pl.BlockSpec((C, Cin), const),   # W_end^T
                pl.BlockSpec((C, 1), const),     # b_end^T
                pl.BlockSpec((M3, C), const),    # W_cat^T = [W_logit | W_mean | W_std]^T
                pl.BlockSpec((M3, 1), const),    # b_cat^T
            ],
            out_specs=pl.BlockSpec((b_tile, M3, l_tile), lambda bi, li: (bi, 0, li)),
        ),
        compiler_params=pltpu.CompilerParams(
            dimension_semantics=("parallel", "parallel"),
            vmem_limit_bytes=vmem_limit,
        ),
        cost_estimate=cost,
    )(x_ncl, wet, bet, wct, bct)

    # Head split + permute(0, 2, 1): cheap wrapper-side layout plumbing, fused by XLA downstream.
    logits = jnp.transpose(fused[:, :M, :], (0, 2, 1))
    loc = jnp.transpose(fused[:, M:2 * M, :], (0, 2, 1))
    scale = jnp.transpose(fused[:, 2 * M:, :], (0, 2, 1))
    return logits, loc, scale


def init_params(key, in_channels, channels, mixture_size):
    """Deterministic synthetic parameters, stored as (Cin, Cout) matmul weights.

    Conv1d(kernel_size=1) weight (Cout, Cin, 1) is the transpose of these matrices;
    we initialize directly in matmul layout.
    """
    ks = jax.random.split(key, 8)

    def w(k, shape, fan_in):
        bound = 1.0 / jnp.sqrt(fan_in)
        return jax.random.uniform(k, shape, jnp.float32, -bound, bound)

    we = w(ks[0], (in_channels, channels), in_channels)
    be = w(ks[1], (1, channels), in_channels)
    wl = w(ks[2], (channels, mixture_size), channels)
    bl = w(ks[3], (1, mixture_size), channels)
    wm = w(ks[4], (channels, mixture_size), channels)
    bm = w(ks[5], (1, mixture_size), channels)
    ws = w(ks[6], (channels, mixture_size), channels)
    bs = w(ks[7], (1, mixture_size), channels)
    return we, be, wl, bl, wm, bm, ws, bs


def reference(x_ncl, params):
    """Pure-JAX reference of the PyTorch forward (distribution parameters)."""
    we, be, wl, bl, wm, bm, ws, bs = params
    x = jnp.transpose(x_ncl, (0, 2, 1))                       # (B, L, Cin)
    end = jnp.maximum(x @ we + be, 0.0)                       # (B, L, C)
    logits = end @ wl + bl                                    # (B, L, M)
    loc = end @ wm + bm                                       # (B, L, M)
    scale = _softplus(end @ ws + bs) + _EPS                   # (B, L, M)
    return logits, loc, scale


if __name__ == "__main__":
    # Small shapes consistent with the module: Net(in_channels, Desc(channels, mixture_size))
    B, IN_CH, L = 2, 16, 8          # batch, in_channels, sequence length
    CH, MIX = 8, 4                  # Desc.channels, Desc.mixture_size

    key = jax.random.PRNGKey(0)
    kx, kp = jax.random.split(key)
    x = jax.random.normal(kx, (B, IN_CH, L), jnp.float32)     # NCL, like PyTorch
    params = init_params(kp, IN_CH, CH, MIX)

    logits, loc, scale = wave_net_head(x, params)
    jax.block_until_ready((logits, loc, scale))

    r_logits, r_loc, r_scale = reference(x, params)
    assert logits.shape == (B, L, MIX) and loc.shape == (B, L, MIX) and scale.shape == (B, L, MIX)
    assert jnp.allclose(logits, r_logits, atol=1e-5, rtol=1e-5)
    assert jnp.allclose(loc, r_loc, atol=1e-5, rtol=1e-5)
    assert jnp.allclose(scale, r_scale, atol=1e-5, rtol=1e-5)
    assert bool(jnp.all(scale > 0.0))   # valid LogNormal scale

    # TODO(synk): constructing the MixtureSameFamily/Categorical/LogNormal objects has no
    # Pallas equivalent; the kernel emits the distribution parameters (logits, loc, scale).
    print("KERNEL_OK")
</pallas_src>

<mosaic_0001>
module attributes {stable_mosaic.version = 11 : i64} {
  func.func @_head_kernel(%arg0: i32, %arg1: i32, %arg2: memref<1x16x8xf32, #tpu.memory_space<vmem>>, %arg3: memref<8x16xf32, #tpu.memory_space<vmem>>, %arg4: memref<8x1xf32, #tpu.memory_space<vmem>>, %arg5: memref<12x8xf32, #tpu.memory_space<vmem>>, %arg6: memref<12x1xf32, #tpu.memory_space<vmem>>, %arg7: memref<1x12x8xf32, #tpu.memory_space<vmem>>) attributes {dimension_semantics = [#tpu.dimension_semantics<parallel>, #tpu.dimension_semantics<parallel>], iteration_bounds = array<i64: 2, 1>, scalar_prefetch = 0 : i64, scratch_operands = 0 : i64, tpu.core_type = #tpu.core_type<tc>, window_params = [{transform_indices = @transform_0, window_bounds = array<i64: 1, 16, 8>}, {pipeline_mode = #tpu.pipeline_mode<synchronous>, transform_indices = @transform_1, window_bounds = array<i64: 8, 16>}, {pipeline_mode = #tpu.pipeline_mode<synchronous>, transform_indices = @transform_2, window_bounds = array<i64: 8, 1>}, {pipeline_mode = #tpu.pipeline_mode<synchronous>, transform_indices = @transform_3, window_bounds = array<i64: 12, 8>}, {pipeline_mode = #tpu.pipeline_mode<synchronous>, transform_indices = @transform_4, window_bounds = array<i64: 12, 1>}, {transform_indices = @transform_5, window_bounds = array<i64: 1, 12, 8>}]} {
    %c0 = arith.constant 0 : index
    %c0_0 = arith.constant 0 : index
    %0 = vector.load %arg3[%c0, %c0_0] : memref<8x16xf32, #tpu.memory_space<vmem>>, vector<8x16xf32>
    %c0_1 = arith.constant 0 : index
    %c0_2 = arith.constant 0 : index
    %1 = vector.load %arg5[%c0_1, %c0_2] : memref<12x8xf32, #tpu.memory_space<vmem>>, vector<12x8xf32>
    %c0_3 = arith.constant 0 : index
    %c0_4 = arith.constant 0 : index
    %2 = vector.load %arg4[%c0_3, %c0_4] : memref<8x1xf32, #tpu.memory_space<vmem>>, vector<8x1xf32>
    %3 = vector.shape_cast %2 : vector<8x1xf32> to vector<8x1xf32>
    %4 = vector.broadcast %3 : vector<8x1xf32> to vector<8x8xf32>
    %c0_5 = arith.constant 0 : index
    %c0_6 = arith.constant 0 : index
    %5 = vector.load %arg6[%c0_5, %c0_6] : memref<12x1xf32, #tpu.memory_space<vmem>>, vector<12x1xf32>
    %6 = vector.shape_cast %5 : vector<12x1xf32> to vector<12x1xf32>
    %7 = vector.broadcast %6 : vector<12x1xf32> to vector<12x8xf32>
    %c0_7 = arith.constant 0 : index
    %c0_8 = arith.constant 0 : index
    %c0_9 = arith.constant 0 : index
    %8 = vector.load %arg2[%c0_7, %c0_8, %c0_9] : memref<1x16x8xf32, #tpu.memory_space<vmem>>, vector<1x16x8xf32>
    %9 = vector.shape_cast %8 : vector<1x16x8xf32> to vector<16x8xf32>
    %cst = arith.constant dense<0.000000e+00> : vector<8x8xf32>
    %10 = tpu.matmul %0, %9, %cst {dimension_numbers = #tpu.dot_dimension_numbers<[1], [0], [0], [1], [0, 0, 1, 1], [], []>} : vector<8x16xf32>, vector<16x8xf32>, vector<8x8xf32> -> vector<8x8xf32>
    %11 = arith.addf %10, %4 : vector<8x8xf32>
    %cst_10 = arith.constant 0.000000e+00 : f32
    %12 = vector.broadcast %cst_10 : f32 to vector<8x8xf32>
    %13 = arith.maximumf %11, %12 : vector<8x8xf32>
    %cst_11 = arith.constant dense<0.000000e+00> : vector<12x8xf32>
    %14 = tpu.matmul %1, %13, %cst_11 {dimension_numbers = #tpu.dot_dimension_numbers<[1], [0], [0], [1], [0, 0, 1, 1], [], []>} : vector<12x8xf32>, vector<8x8xf32>, vector<12x8xf32> -> vector<12x8xf32>
    %15 = arith.addf %14, %7 : vector<12x8xf32>
    %16 = vector.extract_strided_slice %15 {offsets = [8, 0], sizes = [4, 8], strides = [1, 1]} : vector<12x8xf32> to vector<4x8xf32>
    %cst_12 = arith.constant 2.000000e+01 : f32
    %17 = vector.broadcast %cst_12 : f32 to vector<4x8xf32>
    %18 = arith.cmpf ogt, %16, %17 : vector<4x8xf32>
    %cst_13 = arith.constant 2.000000e+01 : f32
    %19 = vector.broadcast %cst_13 : f32 to vector<4x8xf32>
    %20 = arith.minimumf %16, %19 : vector<4x8xf32>
    %21 = math.exp %20 : vector<4x8xf32>
    %22 = math.log1p %21 : vector<4x8xf32>
    %23 = arith.select %18, %16, %22 : vector<4x8xi1>, vector<4x8xf32>
    %cst_14 = arith.constant 1.1920929E-7 : f32
    %24 = vector.broadcast %cst_14 : f32 to vector<4x8xf32>
    %25 = arith.addf %23, %24 : vector<4x8xf32>
    %26 = vector.extract_strided_slice %15 {offsets = [0, 0], sizes = [8, 8], strides = [1, 1]} : vector<12x8xf32> to vector<8x8xf32>
    %27 = tpu.concatenate %26, %25 in 0 : vector<8x8xf32>, vector<4x8xf32> -> vector<12x8xf32>
    %c0_15 = arith.constant 0 : index
    %c0_16 = arith.constant 0 : index
    %c0_17 = arith.constant 0 : index
    %28 = vector.load %arg7[%c0_15, %c0_16, %c0_17] : memref<1x12x8xf32, #tpu.memory_space<vmem>>, vector<1x12x8xf32>
    %29 = vector.shape_cast %28 : vector<1x12x8xf32> to vector<12x8xf32>
    %30 = vector.shape_cast %27 : vector<12x8xf32> to vector<1x12x8xf32>
    tpu.vector_store %arg7[%c0_15, %c0_16, %c0_17], %30 {strides = array<i32>} : memref<1x12x8xf32, #tpu.memory_space<vmem>>, vector<1x12x8xf32>,
    return
  }
  func.func @transform_0(%arg0: i32, %arg1: i32) -> (i32, i32, i32) {
    %c0_i32 = arith.constant 0 : i32
    %c0_i32_0 = arith.constant 0 : i32
    return %arg0, %c0_i32, %arg1 : i32, i32, i32
  }
  func.func @transform_1(%arg0: i32, %arg1: i32) -> (i32, i32) {
    %c0_i32 = arith.constant 0 : i32
    %c0_i32_0 = arith.constant 0 : i32
    %c0_i32_1 = arith.constant 0 : i32
    return %c0_i32, %c0_i32_0 : i32, i32
  }
  func.func @transform_2(%arg0: i32, %arg1: i32) -> (i32, i32) {
    %c0_i32 = arith.constant 0 : i32
    %c0_i32_0 = arith.constant 0 : i32
    %c0_i32_1 = arith.constant 0 : i32
    return %c0_i32, %c0_i32_0 : i32, i32
  }
  func.func @transform_3(%arg0: i32, %arg1: i32) -> (i32, i32) {
    %c0_i32 = arith.constant 0 : i32
    %c0_i32_0 = arith.constant 0 : i32
    %c0_i32_1 = arith.constant 0 : i32
    return %c0_i32, %c0_i32_0 : i32, i32
  }
  func.func @transform_4(%arg0: i32, %arg1: i32) -> (i32, i32) {
    %c0_i32 = arith.constant 0 : i32
    %c0_i32_0 = arith.constant 0 : i32
    %c0_i32_1 = arith.constant 0 : i32
    return %c0_i32, %c0_i32_0 : i32, i32
  }
  func.func @transform_5(%arg0: i32, %arg1: i32) -> (i32, i32, i32) {
    %c0_i32 = arith.constant 0 : i32
    %c0_i32_0 = arith.constant 0 : i32
    return %arg0, %c0_i32, %arg1 : i32, i32, i32
  }
}

</mosaic_0001>

<llo_original>
// kernel: tpu_custom_call.1
$region0: #{tpu_custom_call.1}
  #allocation0 [shape = 'u32[]', space=smem, size = 0x4, offset = 0x4, fixed_abs, tag = 'smem constant byte address 0x4 - core index']
  #allocation1 [shape = 'u32[144,128]{1,0:T(1,128)}', space=vmem, size = 0x12000, scoped, tag = 'internal scratch']
  %s0 = inlined_call_operand.vmem [shape: f32[2,16,8], index: 0, kind: input, shape index: {}]
  %s1 = inlined_call_operand.vmem [shape: f32[8,16], index: 1, kind: input, shape index: {}]
  %s2 = inlined_call_operand.vmem [shape: f32[8,1], index: 2, kind: input, shape index: {}]
  %s3 = inlined_call_operand.vmem [shape: f32[12,8], index: 3, kind: input, shape index: {}]
  %s4 = inlined_call_operand.vmem [shape: f32[12,1], index: 4, kind: input, shape index: {}]
  %s5 = inlined_call_operand.vmem [shape: f32[2,12,8], index: 5, kind: output, shape index: {}]
  %s6 = sld [smem:[#allocation0]]
  $region53: #{tpu_custom_call.1} parent=0
    _
  %s8 = ssub.s32 1, %s6
  %s9 = scalar_select 0, %s8, %s6
  loop: start=0, step=1, limit=4
  $region2: #{tpu_custom_call.1} parent=0 // loop_pre_header
    _
  $region3: #{tpu_custom_call.1} parent=0 // loop_header
    %s11 = sphi 0, %s15
    %p12 = scmp.ge.s32.totalorder %s11, 4
    %s18 = sphi 0, %s30
    %s19 = sphi 0, %s26
    %s20 = sphi 0, %s18
    %s21 = sphi 0, %s19
    %s22 = sphi 0, %s20
    %s23 = sphi 0, %s21
    %s35 = sphi 0, %s37
    %s38 = sphi 0, %s35
    %s39 = sphi 0, %s38
    %s55 = sphi 0, %s39
    %s59 = sphi 0, %s59
    %s61 = sphi 0, %s59
    %s62 = sphi 0, %s61
    %s76 = sphi 0, %s62
    %s80 = sphi 0, %s80
    %s82 = sphi 0, %s80
    %s83 = sphi 0, %s82
    %s97 = sphi 0, %s83
    %s101 = sphi 0, %s101
    %s103 = sphi 0, %s101
    %s104 = sphi 0, %s103
    %s118 = sphi 0, %s104
    %s122 = sphi 0, %s122
    %s124 = sphi 0, %s122
    %s125 = sphi 0, %s124
    %s139 = sphi 0, %s125
    %s147 = sphi 0, %s149
    %s150 = sphi 0, %s147
    %s151 = sphi 0, %s150
    %s167 = sphi 0, %s151
  $region4: #{tpu_custom_call.1} parent=0 // loop_header_branch
    %14 = sbr.rel (%p12) target = $region8
  $region5: #{tpu_custom_call.1} parent=0 // loop_body
    %s16 = ssub.s32 %s11, 1
    %s17 = ssub.s32 %s11, 2
    %s24 = sadd.s32 1, %s19
    %p25 = scmp.ge.s32.totalorder %s24, 1
    %s26 = scalar_select %p25, 0, %s24
    %s27 = sadd.s32 1, %s18
    %s28 = scalar_select %p25, %s27, %s18
    %p29 = scmp.ge.s32.totalorder %s28, 2
    %s30 = scalar_select %p29, 0, %s28
    %s31 = ssub.s32 %s18, %s30
    %s32 = ssub.s32 %s19, %s26
    %s33 = sor.u32 %s31, %s32
    %p34 = scmp.eq.s32.totalorder %s33, 0
    %s36 = sadd.s32 %s35, 1
    %s37 = scalar_select %p34, %s35, %s36
    %p40 = pneg %p34
    %p41 = scmp.eq.s32.totalorder %s11, 1
    %p42 = por %p40, %p41
    %p43 = scmp.ne.s32.totalorder %s35, %s38
    %p44 = scmp.eq.s32.totalorder %s11, 0
    %p45 = por %p43, %p44
    %p46 = scmp.ne.s32.totalorder %s35, %s38
    %p47 = scmp.eq.s32.totalorder %s16, 1
    %p48 = por %p46, %p47
    %p49 = scmp.ne.s32.totalorder %s38, %s39
    %p50 = scmp.eq.s32.totalorder %s16, 0
    %p51 = por %p49, %p50
    %p52 = scmp.ne.s32.totalorder %s38, %s39
    %p53 = scmp.eq.s32.totalorder %s17, 1
    %p54 = por %p52, %p53
    %p56 = scmp.ne.s32.totalorder %s39, %s55
    %p57 = scmp.eq.s32.totalorder %s17, 0
    %p58 = por %p56, %p57
    %s60 = sadd.s32 %s59, 1
    %p63 = scmp.eq.s32.totalorder %s11, 1
    %p64 = scmp.ne.s32.totalorder %s59, %s61
    %p65 = scmp.eq.s32.totalorder %s11, 0
    %p66 = por %p64, %p65
    %p67 = scmp.ne.s32.totalorder %s59, %s61
    %p68 = scmp.eq.s32.totalorder %s16, 1
    %p69 = por %p67, %p68
    %p70 = scmp.ne.s32.totalorder %s61, %s62
    %p71 = scmp.eq.s32.totalorder %s16, 0
    %p72 = por %p70, %p71
    %p73 = scmp.ne.s32.totalorder %s61, %s62
    %p74 = scmp.eq.s32.totalorder %s17, 1
    %p75 = por %p73, %p74
    %p77 = scmp.ne.s32.totalorder %s62, %s76
    %p78 = scmp.eq.s32.totalorder %s17, 0
    %p79 = por %p77, %p78
    %s81 = sadd.s32 %s80, 1
    %p84 = scmp.eq.s32.totalorder %s11, 1
    %p85 = scmp.ne.s32.totalorder %s80, %s82
    %p86 = scmp.eq.s32.totalorder %s11, 0
    %p87 = por %p85, %p86
    %p88 = scmp.ne.s32.totalorder %s80, %s82
    %p89 = scmp.eq.s32.totalorder %s16, 1
    %p90 = por %p88, %p89
    %p91 = scmp.ne.s32.totalorder %s82, %s83
    %p92 = scmp.eq.s32.totalorder %s16, 0
    %p93 = por %p91, %p92
    %p94 = scmp.ne.s32.totalorder %s82, %s83
    %p95 = scmp.eq.s32.totalorder %s17, 1
    %p96 = por %p94, %p95
    %p98 = scmp.ne.s32.totalorder %s83, %s97
    %p99 = scmp.eq.s32.totalorder %s17, 0
    %p100 = por %p98, %p99
    %s102 = sadd.s32 %s101, 1
    %p105 = scmp.eq.s32.totalorder %s11, 1
    %p106 = scmp.ne.s32.totalorder %s101, %s103
    %p107 = scmp.eq.s32.totalorder %s11, 0
    %p108 = por %p106, %p107
    %p109 = scmp.ne.s32.totalorder %s101, %s103
    %p110 = scmp.eq.s32.totalorder %s16, 1
    %p111 = por %p109, %p110
    %p112 = scmp.ne.s32.totalorder %s103, %s104
    %p113 = scmp.eq.s32.totalorder %s16, 0
    %p114 = por %p112, %p113
    %p115 = scmp.ne.s32.totalorder %s103, %s104
    %p116 = scmp.eq.s32.totalorder %s17, 1
    %p117 = por %p115, %p116
    %p119 = scmp.ne.s32.totalorder %s104, %s118
    %p120 = scmp.eq.s32.totalorder %s17, 0
    %p121 = por %p119, %p120
    %s123 = sadd.s32 %s122, 1
    %p126 = scmp.eq.s32.totalorder %s11, 1
    %p127 = scmp.ne.s32.totalorder %s122, %s124
    %p128 = scmp.eq.s32.totalorder %s11, 0
    %p129 = por %p127, %p128
    %p130 = scmp.ne.s32.totalorder %s122, %s124
    %p131 = scmp.eq.s32.totalorder %s16, 1
    %p132 = por %p130, %p131
    %p133 = scmp.ne.s32.totalorder %s124, %s125
    %p134 = scmp.eq.s32.totalorder %s16, 0
    %p135 = por %p133, %p134
    %p136 = scmp.ne.s32.totalorder %s124, %s125
    %p137 = scmp.eq.s32.totalorder %s17, 1
    %p138 = por %p136, %p137
    %p140 = scmp.ne.s32.totalorder %s125, %s139
    %p141 = scmp.eq.s32.totalorder %s17, 0
    %p142 = por %p140, %p141
    %s143 = ssub.s32 %s18, %s30
    %s144 = ssub.s32 %s19, %s26
    %s145 = sor.u32 %s143, %s144
    %p146 = scmp.eq.s32.totalorder %s145, 0
    %s148 = sadd.s32 %s147, 1
    %s149 = scalar_select %p146, %s147, %s148
    %p152 = pneg %p146
    %p153 = scmp.eq.s32.totalorder %s11, 1
    %p154 = por %p152, %p153
    %p155 = scmp.ne.s32.totalorder %s147, %s150
    %p156 = scmp.eq.s32.totalorder %s11, 0
    %p157 = por %p155, %p156
    %p158 = scmp.ne.s32.totalorder %s147, %s150
    %p159 = scmp.eq.s32.totalorder %s16, 1
    %p160 = por %p158, %p159
    %p161 = scmp.ne.s32.totalorder %s150, %s151
    %p162 = scmp.eq.s32.totalorder %s16, 0
    %p163 = por %p161, %p162
    %p164 = scmp.ne.s32.totalorder %s150, %s151
    %p165 = scmp.eq.s32.totalorder %s17, 1
    %p166 = por %p164, %p165
    %p168 = scmp.ne.s32.totalorder %s151, %s167
    %p169 = scmp.eq.s32.totalorder %s17, 0
    %p170 = por %p168, %p169
    %p171 = scmp.le.s32.totalorder 1, %s11
    %p172 = scmp.lt.s32.totalorder %s11, 3
    %p173 = pnand %p171, %p172
    %p174 = pneg %p173
    // Predicated region
    $region9: #{tpu_custom_call.1} parent=5 // pred_check
      _
    $region10: #{tpu_custom_call.1} parent=5 // pred_check_branch
      %176 = sbr.rel (%p173) target = $region12
    $region11: #{tpu_custom_call.1} parent=5 // pred_region
      %s177 = ssub.s32 %s11, 1
      // Predicated region
      $region13: #{tpu_custom_call.1} parent=11 // pred_check
        %p178 = pneg %p72
      $region14: #{tpu_custom_call.1} parent=11 // pred_check_branch
        %180 = sbr.rel (%p178) target = $region16
      $region15: #{tpu_custom_call.1} parent=11 // pred_region
        _
      $region16: #{tpu_custom_call.1} parent=11 // pred_fallthru
        _
      // Predicated region
      $region17: #{tpu_custom_call.1} parent=11 // pred_check
        %p181 = pneg %p93
      $region18: #{tpu_custom_call.1} parent=11 // pred_check_branch
        %183 = sbr.rel (%p181) target = $region20
      $region19: #{tpu_custom_call.1} parent=11 // pred_region
        _
      $region20: #{tpu_custom_call.1} parent=11 // pred_fallthru
        _
      // Predicated region
      $region21: #{tpu_custom_call.1} parent=11 // pred_check
        %p184 = pneg %p114
      $region22: #{tpu_custom_call.1} parent=11 // pred_check_branch
        %186 = sbr.rel (%p184) target = $region24
      $region23: #{tpu_custom_call.1} parent=11 // pred_region
        _
      $region24: #{tpu_custom_call.1} parent=11 // pred_fallthru
        _
      // Predicated region
      $region25: #{tpu_custom_call.1} parent=11 // pred_check
        %p187 = pneg %p135
      $region26: #{tpu_custom_call.1} parent=11 // pred_check_branch
        %189 = sbr.rel (%p187) target = $region28
      $region27: #{tpu_custom_call.1} parent=11 // pred_region
        _
      $region28: #{tpu_custom_call.1} parent=11 // pred_fallthru
        _
    $region12: #{tpu_custom_call.1} parent=5 // pred_fallthru
      _
    %p190 = scmp.lt.s32.totalorder %s11, 2
    // Predicated region
    $region29: #{tpu_custom_call.1} parent=5 // pred_check
      %p191 = pneg %p190
    $region30: #{tpu_custom_call.1} parent=5 // pred_check_branch
      %193 = sbr.rel (%p191) target = $region32
    $region31: #{tpu_custom_call.1} parent=5 // pred_region
      // Predicated region
      $region33: #{tpu_custom_call.1} parent=31 // pred_check
        %p194 = pneg %p45
      $region34: #{tpu_custom_call.1} parent=31 // pred_check_branch
        %196 = sbr.rel (%p194) target = $region36
      $region35: #{tpu_custom_call.1} parent=31 // pred_region
        %p197 = scmp.lt.s32.totalorder %s18, 1
        %s198 = scalar_select %p197, %s18, 1
        %p199 = scmp.lt.s32.totalorder %s19, 0
        %s200 = scalar_select %p199, %s19, 0
        %s201 = smul.addr %s198, 2
        %s202 = sadd.s32 %s200, %s201
        %s203 = smul.addr %s202, 8
        %s204 = scalar_lea.vmem %s0, %s203
      $region36: #{tpu_custom_call.1} parent=31 // pred_fallthru
        _
    $region32: #{tpu_custom_call.1} parent=5 // pred_fallthru
      _
    %p205 = scmp.le.s32.totalorder 1, %s11
    %p206 = scmp.lt.s32.totalorder %s11, 3
    %p207 = pnand %p205, %p206
    %p208 = pneg %p207
    // Predicated region
    $region37: #{tpu_custom_call.1} parent=5 // pred_check
      _
    $region38: #{tpu_custom_call.1} parent=5 // pred_check_branch
      %210 = sbr.rel (%p207) target = $region40
    $region39: #{tpu_custom_call.1} parent=5 // pred_region
      %s211 = ssub.s32 %s11, 1
      %p212 = scmp.lt.s32.totalorder %s20, 1
      %s213 = scalar_select %p212, %s20, 1
      %p214 = scmp.lt.s32.totalorder %s21, 0
      %s215 = scalar_select %p214, %s21, 0
      %s216 = smul.addr %s213, 2
      %s217 = sadd.s32 %s215, %s216
      %s218 = smul.addr %s217, 8
      %s219 = scalar_lea.vmem %s0, %s218
      %p220 = pneg %p51
      %p221 = pneg %p48
      %p222 = pneg %p72
      %p223 = pneg %p69
      %p224 = pneg %p93
      %p225 = pneg %p90
      %p226 = pneg %p114
      %p227 = pneg %p111
      %p228 = pneg %p135
      %p229 = pneg %p132
      %p230 = pneg %p163
      %p231 = pneg %p160
      %p232 = scmp.lt.s32.totalorder %s20, 1
      %s233 = scalar_select %p232, %s20, 1
      %p234 = scmp.lt.s32.totalorder %s21, 0
      %s235 = scalar_select %p234, %s21, 0
      %s236 = smul.addr %s233, 2
      %s237 = sadd.s32 %s235, %s236
      %s238 = smul.addr %s237, 8
      %s239 = scalar_lea.vmem %s5, %s238
      %p240 = scmp.lt.s32.totalorder %s20, 1
      %s241 = scalar_select %p240, %s20, 1
      %p242 = scmp.lt.s32.totalorder %s21, 0
      %s243 = scalar_select %p242, %s21, 0
      %s244 = smul.addr %s241, 2
      %s245 = sadd.s32 %s243, %s244
      %s246 = smul.addr %s245, 8
      %s247 = scalar_lea.vmem %s0, %s246
      %p248 = scmp.lt.s32.totalorder %s20, 1
      %s249 = scalar_select %p248, %s20, 1
      %p250 = scmp.lt.s32.totalorder %s21, 0
      %s251 = scalar_select %p250, %s21, 0
      %s252 = smul.addr %s249, 2
      %s253 = sadd.s32 %s251, %s252
      %s254 = smul.addr %s253, 8
      %s255 = scalar_lea.vmem %s5, %s254
      %v256 = vld [vmem:[%s1] sm:$0xff]
      %v257 = vld [vmem:[%s3] sm:$0xff]
      %v258 = vld [vmem:[%s3 + $0x8] sm:$0xf]
      %v259 = vld [vmem:[%s2] sm:$0xff]
      %261 = vset.pattern.permute.xlu0 0
      %262 = vperm.xlu0 %261, %v259
      %v263 = vpop.permute.xlu0 %262
      %v265 = vld [vmem:[%s4] sm:$0xff]
      %v266 = vld [vmem:[%s4 + $0x8] sm:$0xf]
      %268 = vset.pattern.permute.xlu0 0
      %269 = vperm.xlu0 %268, %v265
      %v270 = vpop.permute.xlu0 %269
      %273 = vset.pattern.permute.xlu0 0
      %274 = vperm.xlu0 %273, %v266
      %v275 = vpop.permute.xlu0 %274
      %v277 = vld [vmem:[%s247] sm:$0xff]
      %v278 = vld [vmem:[%s247 + $0x8] sm:$0xff]
      %vm279 = vcmask 130048
      %v281 = vsel %vm279, %v256, 0
      %283 = vmatprep.subr.mxu0 0.0
      %284 = vmatpush1.msra.mxu0 %v277
      %285 = vmatprep.subr.mxu0 0.0
      %286 = vmatpush1.msra.mxu0 %v278
      %287 = vmatprep.subr.mxu0 0.0
      %288 = vmatpush1.msra.mxu0 0.0
      %289 = vmatprep.subr.mxu0 0.0
      %290 = vmatpush1.msra.mxu0 0.0
      %291 = vmatprep.subr.mxu0 0.0
      %292 = vmatpush1.msra.mxu0 0.0
      %293 = vmatprep.subr.mxu0 0.0
      %294 = vmatpush1.msra.mxu0 0.0
      %295 = vmatprep.subr.mxu0 0.0
      %296 = vmatpush1.msra.mxu0 0.0
      %297 = vmatprep.subr.mxu0 0.0
      %298 = vmatpush1.msra.mxu0 0.0
      %299 = vmatprep.subr.mxu0 0.0
      %300 = vmatpush1.msra.mxu0 0.0
      %301 = vmatprep.subr.mxu0 0.0
      %302 = vmatpush1.msra.mxu0 0.0
      %303 = vmatprep.subr.mxu0 0.0
      %304 = vmatpush1.msra.mxu0 0.0
      %305 = vmatprep.subr.mxu0 0.0
      %306 = vmatpush1.msra.mxu0 0.0
      %307 = vmatprep.subr.mxu0 0.0
      %308 = vmatpush1.msra.mxu0 0.0
      %309 = vmatprep.subr.mxu0 0.0
      %310 = vmatpush1.msra.mxu0 0.0
      %311 = vmatprep.subr.mxu0 0.0
      %312 = vmatpush1.msra.mxu0 0.0
      %313 = vmatprep.subr.mxu0 0.0
      %314 = vmatpush1.msra.mxu0 0.0
      %315 = vmatprep.subr.mxu0 0.0
      %316 = vmatpush1.msra.mxu0 0.0
      %317 = vmatprep.subr.mxu0 0.0
      %318 = vmatpush1.msra.mxu0 0.0
      %319 = vmatprep.subr.mxu0 0.0
      %320 = vmatpush1.msra.mxu0 0.0
      %321 = vmatprep.subr.mxu0 0.0
      %322 = vmatpush1.msra.mxu0 0.0
      %323 = vmatprep.subr.mxu0 0.0
      %324 = vmatpush1.msra.mxu0 0.0
      %325 = vmatprep.subr.mxu0 0.0
      %326 = vmatpush1.msra.mxu0 0.0
      %327 = vmatprep.subr.mxu0 0.0
      %328 = vmatpush1.msra.mxu0 0.0
      %329 = vmatprep.subr.mxu0 0.0
      %330 = vmatpush1.msra.mxu0 0.0
      %331 = vmatprep.subr.mxu0 0.0
      %332 = vmatpush1.msra.mxu0 0.0
      %333 = vmatprep.subr.mxu0 0.0
      %334 = vmatpush1.msra.mxu0 0.0
      %335 = vmatprep.subr.mxu0 0.0
      %336 = vmatpush1.msra.mxu0 0.0
      %337 = vmatprep.subr.mxu0 0.0
      %338 = vmatpush1.msra.mxu0 0.0
      %339 = vmatprep.subr.mxu0 0.0
      %340 = vmatpush1.msra.mxu0 0.0
      %341 = vmatprep.subr.mxu0 0.0
      %342 = vmatpush1.msra.mxu0 0.0
      %343 = vmatprep.subr.mxu0 0.0
      %344 = vmatpush1.msra.mxu0 0.0
      %345 = vmatprep.subr.mxu0 0.0
      %346 = vmatpush1.msra.mxu0 0.0
      %347 = vmatprep.mubr.f32.mxu0 0.0
      %348 = vmatmul.mubr.f32.gmra.mrb[0].mxu0 %v281
      %v349 = vpop.f32.mrb[0].mxu0
      %v350 = vadd.f32 %v263, %v349
      %v351 = vpop.f32.mrb[0].mxu0
      %352 = vdwg.mxu0
      %v353 = vmax.f32 %v350, 0.0
      %vm354 = vcmask 64512
      %v356 = vsel %vm354, %v257, 0
      %v359 = vsel %vm354, %v258, 0
      %361 = vmatprep.subr.mxu0 0.0
      %362 = vmatpush1.msra.mxu0 %v353
      %363 = vmatprep.subr.mxu0 0.0
      %364 = vmatpush1.msra.mxu0 0.0
      %365 = vmatprep.subr.mxu0 0.0
      %366 = vmatpush1.msra.mxu0 0.0
      %367 = vmatprep.subr.mxu0 0.0
      %368 = vmatpush1.msra.mxu0 0.0
      %369 = vmatprep.subr.mxu0 0.0
      %370 = vmatpush1.msra.mxu0 0.0
      %371 = vmatprep.subr.mxu0 0.0
      %372 = vmatpush1.msra.mxu0 0.0
      %373 = vmatprep.subr.mxu0 0.0
      %374 = vmatpush1.msra.mxu0 0.0
      %375 = vmatprep.subr.mxu0 0.0
      %376 = vmatpush1.msra.mxu0 0.0
      %377 = vmatprep.subr.mxu0 0.0
      %378 = vmatpush1.msra.mxu0 0.0
      %379 = vmatprep.subr.mxu0 0.0
      %380 = vmatpush1.msra.mxu0 0.0
      %381 = vmatprep.subr.mxu0 0.0
      %382 = vmatpush1.msra.mxu0 0.0
      %383 = vmatprep.subr.mxu0 0.0
      %384 = vmatpush1.msra.mxu0 0.0
      %385 = vmatprep.subr.mxu0 0.0
      %386 = vmatpush1.msra.mxu0 0.0
      %387 = vmatprep.subr.mxu0 0.0
      %388 = vmatpush1.msra.mxu0 0.0
      %389 = vmatprep.subr.mxu0 0.0
      %390 = vmatpush1.msra.mxu0 0.0
      %391 = vmatprep.subr.mxu0 0.0
      %392 = vmatpush1.msra.mxu0 0.0
      %393 = vmatprep.subr.mxu0 0.0
      %394 = vmatpush1.msra.mxu0 0.0
      %395 = vmatprep.subr.mxu0 0.0
      %396 = vmatpush1.msra.mxu0 0.0
      %397 = vmatprep.subr.mxu0 0.0
      %398 = vmatpush1.msra.mxu0 0.0
      %399 = vmatprep.subr.mxu0 0.0
      %400 = vmatpush1.msra.mxu0 0.0
      %401 = vmatprep.subr.mxu0 0.0
      %402 = vmatpush1.msra.mxu0 0.0
      %403 = vmatprep.subr.mxu0 0.0
      %404 = vmatpush1.msra.mxu0 0.0
      %405 = vmatprep.subr.mxu0 0.0
      %406 = vmatpush1.msra.mxu0 0.0
      %407 = vmatprep.subr.mxu0 0.0
      %408 = vmatpush1.msra.mxu0 0.0
      %409 = vmatprep.subr.mxu0 0.0
      %410 = vmatpush1.msra.mxu0 0.0
      %411 = vmatprep.subr.mxu0 0.0
      %412 = vmatpush1.msra.mxu0 0.0
      %413 = vmatprep.subr.mxu0 0.0
      %414 = vmatpush1.msra.mxu0 0.0
      %415 = vmatprep.subr.mxu0 0.0
      %416 = vmatpush1.msra.mxu0 0.0
      %417 = vmatprep.subr.mxu0 0.0
      %418 = vmatpush1.msra.mxu0 0.0
      %419 = vmatprep.subr.mxu0 0.0
      %420 = vmatpush1.msra.mxu0 0.0
      %421 = vmatprep.subr.mxu0 0.0
      %422 = vmatpush1.msra.mxu0 0.0
      %423 = vmatprep.subr.mxu0 0.0
      %424 = vmatpush1.msra.mxu0 0.0
      %425 = vmatprep.mubr.f32.mxu0 0.0
      %426 = vmatmul.mubr.f32.gmra.mrb[0].mxu0 %v356
      %v427 = vpop.f32.mrb[0].mxu0
      %v428 = vadd.f32 %v270, %v427
      %v429 = vpop.f32.mrb[0].mxu0
      %430 = vmatprep.mubr.f32.mxu0 0.0
      %431 = vmatmul.mubr.f32.gmra.mrb[0].mxu0 %v359
      %v432 = vpop.f32.mrb[0].mxu0
      %v433 = vadd.f32 %v275, %v432
      %v434 = vpop.f32.mrb[0].mxu0
      %435 = vdwg.mxu0
      %vm436 = vcmp.gt.f32.partialorder %v433, 20.0
      %v437 = vmin.f32 %v433, 20.0
      %v438 = vmul.f32 %v437, 1.442695
      %v439 = vpow.pop %v438
      %v440 = vadd.f32 %v439, 1.0
      %v441 = vlog2.pop %v440
      %v442 = vmul.f32 %v441, 0.6931472
      %v443 = vmul.f32 -0.5, %v439
      %v444 = vadd.f32 %v443, 1.0
      %v445 = vmul.f32 %v444, %v439
      %v446 = vand.u32 2147483647, %v439
      %vm447 = vcmp.lt.f32.partialorder %v446, 0.0004427343
      %v448 = vsel %vm447, %v445, %v442
      %v449 = vsel %vm436, %v433, %v448
      %v450 = vadd.f32 %v449, 1.1920929e-07
      %451 = vst.msk [vmem:[%s255] sm:$0xff] %vm354, %v428
      %vm452 = vcmask 60416
      %453 = vst.msk [vmem:[%s255 + $0x8] sm:$0xf] %vm452, %v450
      %p454 = scmp.lt.s32.totalorder %s20, 1
      %s455 = scalar_select %p454, %s20, 1
      %p456 = scmp.lt.s32.totalorder %s21, 0
      %s457 = scalar_select %p456, %s21, 0
      %s458 = smul.addr %s455, 2
      %s459 = sadd.s32 %s457, %s458
      %s460 = smul.addr %s459, 8
      %s461 = scalar_lea.vmem %s5, %s460
      // Predicated region
      $region41: #{tpu_custom_call.1} parent=39 // pred_check
        %p462 = pneg %p160
      $region42: #{tpu_custom_call.1} parent=39 // pred_check_branch
        %464 = sbr.rel (%p462) target = $region44
      $region43: #{tpu_custom_call.1} parent=39 // pred_region
        _
      $region44: #{tpu_custom_call.1} parent=39 // pred_fallthru
        _
    $region40: #{tpu_custom_call.1} parent=5 // pred_fallthru
      _
    %p465 = scmp.le.s32.totalorder 2, %s11
    // Predicated region
    $region45: #{tpu_custom_call.1} parent=5 // pred_check
      %p466 = pneg %p465
    $region46: #{tpu_custom_call.1} parent=5 // pred_check_branch
      %468 = sbr.rel (%p466) target = $region48
    $region47: #{tpu_custom_call.1} parent=5 // pred_region
      %s469 = ssub.s32 %s11, 2
      // Predicated region
      $region49: #{tpu_custom_call.1} parent=47 // pred_check
        %p470 = pneg %p166
      $region50: #{tpu_custom_call.1} parent=47 // pred_check_branch
        %472 = sbr.rel (%p470) target = $region52
      $region51: #{tpu_custom_call.1} parent=47 // pred_region
        %p473 = scmp.lt.s32.totalorder %s22, 1
        %s474 = scalar_select %p473, %s22, 1
        %p475 = scmp.lt.s32.totalorder %s23, 0
        %s476 = scalar_select %p475, %s23, 0
        %s477 = smul.addr %s474, 2
        %s478 = sadd.s32 %s476, %s477
        %s479 = smul.addr %s478, 8
        %s480 = scalar_lea.vmem %s5, %s479
      $region52: #{tpu_custom_call.1} parent=47 // pred_fallthru
        _
    $region48: #{tpu_custom_call.1} parent=5 // pred_fallthru
      _
  $region6: #{tpu_custom_call.1} parent=0 // loop_footer
    %s15 = sadd.s32 1, %s11
  $region7: #{tpu_custom_call.1} parent=0 // loop_footer_branch
    %10 = sbr.rel target = $region3
  $region8: #{tpu_custom_call.1} parent=0 // loop_exit
    _

</llo_original>
